<compile_context>
chip_gen: v6e
topology: v6e:2x2x1
jax: 0.10.0
libtpu: 0.0.40
codegen_flags: <defaults>
</compile_context>

<pallas_src>
import jax
import jax.numpy as jnp
from jax.experimental import pallas as pl
from jax.experimental.pallas import tpu as pltpu

IN_CHANNELS = 28 * 28      # 784
HIDDEN_CHANNELS = 200
OUT_CLASSES = 10

HIDDEN_PAD = 256           # lane-dense / MXU-aligned hidden width
OUT_PAD = 128              # lane-dense output width (avoid vst.msk partial stores)
TM_MAX = 1024              # max rows per tile; >=2 grid steps for n>1024 (v7x megacore)


def ffn_kernel(x_ref, w1_ref, b1_ref, w2_ref, b2_ref, o_ref):
    # fc1: bf16 MXU inputs (x already bf16 in HBM), f32 accumulation, f32 bias add.
    h = jnp.dot(x_ref[...], w1_ref[...], preferred_element_type=jnp.float32)
    h = h + b1_ref[...]
    # fc2: fused — the hidden activation never touches HBM.
    y = jnp.dot(h.astype(jnp.bfloat16), w2_ref[...], preferred_element_type=jnp.float32)
    o_ref[...] = (y + b2_ref[...]).astype(o_ref.dtype)


def feed_forward_net(x, w1p, b1p, w2p, b2p, *, tm_max=TM_MAX):
    """x: (N, IN_CHANNELS) bf16 (producer should emit bf16 — it is the dominant HBM
    stream); padded params from pad_params(). Returns (N, OUT_CLASSES) f32."""
    n = x.shape[0]
    # Small batch: one block exactly the array size (no inflated DMA / MXU passes).
    # Large batch: fixed 1024-row tiles; the last block may be partial (masked stores).
    tm = n if n <= tm_max else tm_max
    grid = pl.cdiv(n, tm)

    out = pl.pallas_call(
        ffn_kernel,
        out_shape=jax.ShapeDtypeStruct((n, OUT_PAD), jnp.float32),
        grid_spec=pltpu.PrefetchScalarGridSpec(
            num_scalar_prefetch=0,
            grid=(grid,),
            in_specs=[
                pl.BlockSpec((tm, IN_CHANNELS), lambda i: (i, 0)),          # x: streamed tiles
                pl.BlockSpec((IN_CHANNELS, HIDDEN_PAD), lambda i: (0, 0)),  # w1: resident
                pl.BlockSpec((1, HIDDEN_PAD), lambda i: (0, 0)),            # b1: resident
                pl.BlockSpec((HIDDEN_PAD, OUT_PAD), lambda i: (0, 0)),      # w2: resident
                pl.BlockSpec((1, OUT_PAD), lambda i: (0, 0)),               # b2: resident
            ],
            out_specs=pl.BlockSpec((tm, OUT_PAD), lambda i: (i, 0)),
        ),
        compiler_params=pltpu.CompilerParams(
            dimension_semantics=("parallel",),     # v7x: shard batch tiles across 2 TCs
            vmem_limit_bytes=32 * 1024 * 1024,     # ~5x real footprint; headroom on v7x
        ),
    )(x, w1p, b1p, w2p, b2p)

    # Strip the lane padding of the 10-class output. Consumers that can read the padded
    # (n, 128) buffer directly should take `out` as-is and skip this copy.
    return out[:, :OUT_CLASSES]


def init_params(key):
    """nn.Linear-style uniform(-1/sqrt(fan_in), 1/sqrt(fan_in)) init, logical shapes."""
    k1, k2, k3, k4 = jax.random.split(key, 4)
    bound1 = 1.0 / jnp.sqrt(IN_CHANNELS)
    bound2 = 1.0 / jnp.sqrt(HIDDEN_CHANNELS)
    w1 = jax.random.uniform(k1, (IN_CHANNELS, HIDDEN_CHANNELS), jnp.float32, -bound1, bound1)
    b1 = jax.random.uniform(k2, (HIDDEN_CHANNELS,), jnp.float32, -bound1, bound1)
    w2 = jax.random.uniform(k3, (HIDDEN_CHANNELS, OUT_CLASSES), jnp.float32, -bound2, bound2)
    b2 = jax.random.uniform(k4, (OUT_CLASSES,), jnp.float32, -bound2, bound2)
    return w1, b1, w2, b2


def pad_params(w1, b1, w2, b2):
    """Zero-pad to lane-dense shapes; weights stored bf16 (MXU inputs), biases f32."""
    w1p = jnp.zeros((IN_CHANNELS, HIDDEN_PAD), jnp.float32).at[:, :HIDDEN_CHANNELS].set(w1)
    b1p = jnp.zeros((1, HIDDEN_PAD), jnp.float32).at[0, :HIDDEN_CHANNELS].set(b1)
    w2p = jnp.zeros((HIDDEN_PAD, OUT_PAD), jnp.float32).at[:HIDDEN_CHANNELS, :OUT_CLASSES].set(w2)
    b2p = jnp.zeros((1, OUT_PAD), jnp.float32).at[0, :OUT_CLASSES].set(b2)
    return w1p.astype(jnp.bfloat16), b1p, w2p.astype(jnp.bfloat16), b2p


if __name__ == "__main__":
    key = jax.random.PRNGKey(0)
    k_x, k_x2, k_p = jax.random.split(key, 3)

    w1, b1, w2, b2 = init_params(k_p)
    params = pad_params(w1, b1, w2, b2)

    def reference(x_f32):
        # Pure-JAX f32 reference with the same semantics as fc2(fc1(x)) (no activation).
        return (x_f32 @ w1 + b1) @ w2 + b2

    # Case 1: tiny batch — single grid step, block shape equals the full array.
    batch = 8
    x = jax.random.normal(k_x, (batch, IN_CHANNELS), jnp.float32).astype(jnp.bfloat16)
    out = jax.block_until_ready(feed_forward_net(x, *params))
    ref = reference(x.astype(jnp.float32))
    assert out.shape == (batch, OUT_CLASSES)
    # bf16 inputs/weights with f32 accumulation -> loosened tolerance vs the f32 reference.
    assert jnp.allclose(out, ref, atol=3e-2, rtol=3e-2), float(jnp.max(jnp.abs(out - ref)))

    # Case 2: batch not a multiple of the row tile -> exercises the partial last block
    # (stores beyond n are masked by Pallas; no host-side padding of x).
    batch2 = 40
    x2 = jax.random.normal(k_x2, (batch2, IN_CHANNELS), jnp.float32).astype(jnp.bfloat16)
    out2 = jax.block_until_ready(feed_forward_net(x2, *params, tm_max=16))
    ref2 = reference(x2.astype(jnp.float32))
    assert out2.shape == (batch2, OUT_CLASSES)
    assert jnp.allclose(out2, ref2, atol=3e-2, rtol=3e-2), float(jnp.max(jnp.abs(out2 - ref2)))

    print("KERNEL_OK")
</pallas_src>

<mosaic_0001>
module attributes {stable_mosaic.version = 11 : i64} {
  func.func @ffn_kernel(%arg0: i32, %arg1: memref<8x784xbf16, #tpu.memory_space<vmem>>, %arg2: memref<784x256xbf16, #tpu.memory_space<vmem>>, %arg3: memref<1x256xf32, #tpu.memory_space<vmem>>, %arg4: memref<256x128xbf16, #tpu.memory_space<vmem>>, %arg5: memref<1x128xf32, #tpu.memory_space<vmem>>, %arg6: memref<8x128xf32, #tpu.memory_space<vmem>>) attributes {dimension_semantics = [#tpu.dimension_semantics<parallel>], iteration_bounds = array<i64: 1>, scalar_prefetch = 0 : i64, scratch_operands = 0 : i64, tpu.core_type = #tpu.core_type<tc>, window_params = [{transform_indices = @transform_0, window_bounds = array<i64: 8, 784>}, {pipeline_mode = #tpu.pipeline_mode<synchronous>, transform_indices = @transform_1, window_bounds = array<i64: 784, 256>}, {pipeline_mode = #tpu.pipeline_mode<synchronous>, transform_indices = @transform_2, window_bounds = array<i64: 1, 256>}, {pipeline_mode = #tpu.pipeline_mode<synchronous>, transform_indices = @transform_3, window_bounds = array<i64: 256, 128>}, {pipeline_mode = #tpu.pipeline_mode<synchronous>, transform_indices = @transform_4, window_bounds = array<i64: 1, 128>}, {transform_indices = @transform_5, window_bounds = array<i64: 8, 128>}]} {
    %c0 = arith.constant 0 : index
    %c0_0 = arith.constant 0 : index
    %0 = vector.load %arg1[%c0, %c0_0] : memref<8x784xbf16, #tpu.memory_space<vmem>>, vector<8x784xbf16>
    %c0_1 = arith.constant 0 : index
    %c0_2 = arith.constant 0 : index
    %1 = vector.load %arg2[%c0_1, %c0_2] : memref<784x256xbf16, #tpu.memory_space<vmem>>, vector<784x256xbf16>
    %cst = arith.constant dense<0.000000e+00> : vector<8x256xf32>
    %2 = tpu.matmul %0, %1, %cst {dimension_numbers = #tpu.dot_dimension_numbers<[1], [0], [0], [1], [0, 0, 1, 1], [], []>} : vector<8x784xbf16>, vector<784x256xbf16>, vector<8x256xf32> -> vector<8x256xf32>
    %c0_3 = arith.constant 0 : index
    %c0_4 = arith.constant 0 : index
    %3 = vector.load %arg3[%c0_3, %c0_4] : memref<1x256xf32, #tpu.memory_space<vmem>>, vector<1x256xf32>
    %4 = vector.broadcast %3 : vector<1x256xf32> to vector<8x256xf32>
    %5 = arith.addf %2, %4 : vector<8x256xf32>
    %6 = arith.truncf %5 : vector<8x256xf32> to vector<8x256xbf16>
    %c0_5 = arith.constant 0 : index
    %c0_6 = arith.constant 0 : index
    %7 = vector.load %arg4[%c0_5, %c0_6] : memref<256x128xbf16, #tpu.memory_space<vmem>>, vector<256x128xbf16>
    %cst_7 = arith.constant dense<0.000000e+00> : vector<8x128xf32>
    %8 = tpu.matmul %6, %7, %cst_7 {dimension_numbers = #tpu.dot_dimension_numbers<[1], [0], [0], [1], [0, 0, 1, 1], [], []>} : vector<8x256xbf16>, vector<256x128xbf16>, vector<8x128xf32> -> vector<8x128xf32>
    %c0_8 = arith.constant 0 : index
    %c0_9 = arith.constant 0 : index
    %9 = vector.load %arg5[%c0_8, %c0_9] : memref<1x128xf32, #tpu.memory_space<vmem>>, vector<1x128xf32>
    %10 = vector.broadcast %9 : vector<1x128xf32> to vector<8x128xf32>
    %11 = arith.addf %8, %10 : vector<8x128xf32>
    %c0_10 = arith.constant 0 : index
    %c0_11 = arith.constant 0 : index
    %12 = vector.load %arg6[%c0_10, %c0_11] : memref<8x128xf32, #tpu.memory_space<vmem>>, vector<8x128xf32>
    tpu.vector_store %arg6[%c0_10, %c0_11], %11 {strides = array<i32>} : memref<8x128xf32, #tpu.memory_space<vmem>>, vector<8x128xf32>,
    return
  }
  func.func @transform_0(%arg0: i32) -> (i32, i32) {
    %c0_i32 = arith.constant 0 : i32
    %c0_i32_0 = arith.constant 0 : i32
    return %arg0, %c0_i32 : i32, i32
  }
  func.func @transform_1(%arg0: i32) -> (i32, i32) {
    %c0_i32 = arith.constant 0 : i32
    %c0_i32_0 = arith.constant 0 : i32
    %c0_i32_1 = arith.constant 0 : i32
    return %c0_i32, %c0_i32_0 : i32, i32
  }
  func.func @transform_2(%arg0: i32) -> (i32, i32) {
    %c0_i32 = arith.constant 0 : i32
    %c0_i32_0 = arith.constant 0 : i32
    %c0_i32_1 = arith.constant 0 : i32
    return %c0_i32, %c0_i32_0 : i32, i32
  }
  func.func @transform_3(%arg0: i32) -> (i32, i32) {
    %c0_i32 = arith.constant 0 : i32
    %c0_i32_0 = arith.constant 0 : i32
    %c0_i32_1 = arith.constant 0 : i32
    return %c0_i32, %c0_i32_0 : i32, i32
  }
  func.func @transform_4(%arg0: i32) -> (i32, i32) {
    %c0_i32 = arith.constant 0 : i32
    %c0_i32_0 = arith.constant 0 : i32
    %c0_i32_1 = arith.constant 0 : i32
    return %c0_i32, %c0_i32_0 : i32, i32
  }
  func.func @transform_5(%arg0: i32) -> (i32, i32) {
    %c0_i32 = arith.constant 0 : i32
    %c0_i32_0 = arith.constant 0 : i32
    return %arg0, %c0_i32 : i32, i32
  }
}

</mosaic_0001>

<llo_original>
// kernel: tpu_custom_call.1
$region0: #{tpu_custom_call.1}
  #allocation0 [shape = 'u32[]', space=smem, size = 0x4, offset = 0x4, fixed_abs, tag = 'smem constant byte address 0x4 - core index']
  #allocation1 [shape = 'u32[144,128]{1,0:T(1,128)}', space=vmem, size = 0x12000, scoped, tag = 'internal scratch']
  %s0 = inlined_call_operand.hbm [shape: bf16[8,784], index: 0, kind: input, shape index: {}]
  %s1 = inlined_call_operand.hbm [shape: bf16[784,256], index: 1, kind: input, shape index: {}]
  %s2 = inlined_call_operand.vmem [shape: f32[1,256], index: 2, kind: input, shape index: {}]
  %s3 = inlined_call_operand.hbm [shape: bf16[256,128], index: 3, kind: input, shape index: {}]
  %s4 = inlined_call_operand.vmem [shape: f32[1,128], index: 4, kind: input, shape index: {}]
  %s5 = inlined_call_operand.hbm [shape: f32[8,128], index: 5, kind: output, shape index: {}]
  %s6 = sld [smem:[#allocation0]]
  $region42: #{tpu_custom_call.1} parent=0
    _
  %s8 = ssub.s32 1, %s6
  %s9 = scalar_select 0, %s8, %s6
  $region1: #{tpu_custom_call.1} parent=0
    #allocation2 [shape = 'u8[14336]{0}', space=vmem, size = 0x3800, scoped, tag = 'input window, operand 0, single buffered']
    #allocation3 [shape = 's32[1]{0}', space=sflag, size = 0x4, scoped, tag = 'scoped memory for tpu_custom_call.1']
    #allocation4 [shape = 's32[1]{0}', space=sflag, size = 0x4, scoped, tag = 'scoped memory for tpu_custom_call.1']
    #allocation5 [shape = 'u8[401408]{0}', space=vmem, size = 0x62000, scoped, tag = 'input window, operand 1, single buffered']
    #allocation6 [shape = 's32[1]{0}', space=sflag, size = 0x4, scoped, tag = 'scoped memory for tpu_custom_call.1']
    #allocation7 [shape = 'u8[65536]{0}', space=vmem, size = 0x10000, scoped, tag = 'input window, operand 3, single buffered']
    #allocation8 [shape = 'u8[4096]{0}', space=vmem, size = 0x1000, scoped, tag = 'output window, operand 0, single buffered']
    %10 = vsyncpa [#allocation3], 0
    %11 = vsyncpa [#allocation6], 0
    %12 = vsyncpa [#allocation4], 0
    // Predicated region
    $region2: #{tpu_custom_call.1} parent=1 // pred_check
      _
    $region3: #{tpu_custom_call.1} parent=1 // pred_check_branch
      %14 = sbr.rel (0) target = $region5
    $region4: #{tpu_custom_call.1} parent=1 // pred_region
      %s16 = ssub.s32 448, 448
      %17 = vsyncadd [#allocation3], %s16
      %s19 = sshll.u32 [#allocation2], 4
      %s20 = int_to_ptr.vmem [resolvable:$true] %s19
      %22 = dma.hbm_to_vmem [thread:$0]  %s0, 448, %s20, [#allocation3]
    $region5: #{tpu_custom_call.1} parent=1 // pred_fallthru
      _
    // Predicated region
    $region6: #{tpu_custom_call.1} parent=1 // pred_check
      _
    $region7: #{tpu_custom_call.1} parent=1 // pred_check_branch
      %24 = sbr.rel (0) target = $region9
    $region8: #{tpu_custom_call.1} parent=1 // pred_region
      %s26 = ssub.s32 12544, 12544
      %27 = vsyncadd [#allocation6], %s26
      %s28 = sshll.u32 [#allocation5], 4
      %s29 = int_to_ptr.vmem [resolvable:$true] %s28
      %34 = dma.hbm_to_vmem [thread:$0]  %s1, 12544, %s29, [#allocation6], 128, 128, 8
    $region9: #{tpu_custom_call.1} parent=1 // pred_fallthru
      _
    // Predicated region
    $region10: #{tpu_custom_call.1} parent=1 // pred_check
      _
    $region11: #{tpu_custom_call.1} parent=1 // pred_check_branch
      %36 = sbr.rel (0) target = $region13
    $region12: #{tpu_custom_call.1} parent=1 // pred_region
      _
    $region13: #{tpu_custom_call.1} parent=1 // pred_fallthru
      _
    // Predicated region
    $region14: #{tpu_custom_call.1} parent=1 // pred_check
      _
    $region15: #{tpu_custom_call.1} parent=1 // pred_check_branch
      %38 = sbr.rel (0) target = $region17
    $region16: #{tpu_custom_call.1} parent=1 // pred_region
      %s40 = ssub.s32 2048, 2048
      %41 = vsyncadd [#allocation6], %s40
      %s42 = sshll.u32 [#allocation7], 4
      %s43 = int_to_ptr.vmem [resolvable:$true] %s42
      %48 = dma.hbm_to_vmem [thread:$0]  %s3, 2048, %s43, [#allocation6], 64, 64, 4
    $region17: #{tpu_custom_call.1} parent=1 // pred_fallthru
      _
    // Predicated region
    $region18: #{tpu_custom_call.1} parent=1 // pred_check
      _
    $region19: #{tpu_custom_call.1} parent=1 // pred_check_branch
      %50 = sbr.rel (0) target = $region21
    $region20: #{tpu_custom_call.1} parent=1 // pred_region
      _
    $region21: #{tpu_custom_call.1} parent=1 // pred_fallthru
      _
    // Predicated region
    $region22: #{tpu_custom_call.1} parent=1 // pred_check
      _
    $region23: #{tpu_custom_call.1} parent=1 // pred_check_branch
      %52 = sbr.rel (0) target = $region25
    $region24: #{tpu_custom_call.1} parent=1 // pred_region
      %53 = dma.done [#allocation3], 448
    $region25: #{tpu_custom_call.1} parent=1 // pred_fallthru
      _
    // Predicated region
    $region26: #{tpu_custom_call.1} parent=1 // pred_check
      _
    $region27: #{tpu_custom_call.1} parent=1 // pred_check_branch
      %55 = sbr.rel (0) target = $region29
    $region28: #{tpu_custom_call.1} parent=1 // pred_region
      %56 = dma.done [#allocation6], 12544
    $region29: #{tpu_custom_call.1} parent=1 // pred_fallthru
      _
    // Predicated region
    $region30: #{tpu_custom_call.1} parent=1 // pred_check
      _
    $region31: #{tpu_custom_call.1} parent=1 // pred_check_branch
      %58 = sbr.rel (0) target = $region33
    $region32: #{tpu_custom_call.1} parent=1 // pred_region
      %59 = dma.done [#allocation6], 2048
    $region33: #{tpu_custom_call.1} parent=1 // pred_fallthru
      _
    %v61 = vld [vmem:[#allocation2] sm:$0xff]
    %v62 = vld [vmem:[#allocation2 + $0x8] sm:$0xff]
    %v63 = vld [vmem:[#allocation2 + $0x10] sm:$0xff]
    %v64 = vld [vmem:[#allocation2 + $0x18] sm:$0xf]
    %v65 = vld [vmem:[#allocation5] sm:$0xff]
    %v66 = vld [vmem:[#allocation5 + $0x8] sm:$0xff]
    %v67 = vld [vmem:[#allocation5 + $0x10] sm:$0xff]
    %v68 = vld [vmem:[#allocation5 + $0x18] sm:$0xff]
    %v69 = vld [vmem:[#allocation5 + $0x20] sm:$0xff]
    %v70 = vld [vmem:[#allocation5 + $0x28] sm:$0xff]
    %v71 = vld [vmem:[#allocation5 + $0x30] sm:$0xff]
    %v72 = vld [vmem:[#allocation5 + $0x38] sm:$0xff]
    %v73 = vld [vmem:[#allocation5 + $0x40] sm:$0xff]
    %v74 = vld [vmem:[#allocation5 + $0x48] sm:$0xff]
    %v75 = vld [vmem:[#allocation5 + $0x50] sm:$0xff]
    %v76 = vld [vmem:[#allocation5 + $0x58] sm:$0xff]
    %v77 = vld [vmem:[#allocation5 + $0x60] sm:$0xff]
    %v78 = vld [vmem:[#allocation5 + $0x68] sm:$0xff]
    %v79 = vld [vmem:[#allocation5 + $0x70] sm:$0xff]
    %v80 = vld [vmem:[#allocation5 + $0x78] sm:$0xff]
    %v81 = vld [vmem:[#allocation5 + $0x80] sm:$0xff]
    %v82 = vld [vmem:[#allocation5 + $0x88] sm:$0xff]
    %v83 = vld [vmem:[#allocation5 + $0x90] sm:$0xff]
    %v84 = vld [vmem:[#allocation5 + $0x98] sm:$0xff]
    %v85 = vld [vmem:[#allocation5 + $0xa0] sm:$0xff]
    %v86 = vld [vmem:[#allocation5 + $0xa8] sm:$0xff]
    %v87 = vld [vmem:[#allocation5 + $0xb0] sm:$0xff]
    %v88 = vld [vmem:[#allocation5 + $0xb8] sm:$0xff]
    %v89 = vld [vmem:[#allocation5 + $0xc0] sm:$0xff]
    %v90 = vld [vmem:[#allocation5 + $0xc8] sm:$0xff]
    %v91 = vld [vmem:[#allocation5 + $0xd0] sm:$0xff]
    %v92 = vld [vmem:[#allocation5 + $0xd8] sm:$0xff]
    %v93 = vld [vmem:[#allocation5 + $0xe0] sm:$0xff]
    %v94 = vld [vmem:[#allocation5 + $0xe8] sm:$0xff]
    %v95 = vld [vmem:[#allocation5 + $0xf0] sm:$0xff]
    %v96 = vld [vmem:[#allocation5 + $0xf8] sm:$0xff]
    %v97 = vld [vmem:[#allocation5 + $0x100] sm:$0xff]
    %v98 = vld [vmem:[#allocation5 + $0x108] sm:$0xff]
    %v99 = vld [vmem:[#allocation5 + $0x110] sm:$0xff]
    %v100 = vld [vmem:[#allocation5 + $0x118] sm:$0xff]
    %v101 = vld [vmem:[#allocation5 + $0x120] sm:$0xff]
    %v102 = vld [vmem:[#allocation5 + $0x128] sm:$0xff]
    %v103 = vld [vmem:[#allocation5 + $0x130] sm:$0xff]
    %v104 = vld [vmem:[#allocation5 + $0x138] sm:$0xff]
    %v105 = vld [vmem:[#allocation5 + $0x140] sm:$0xff]
    %v106 = vld [vmem:[#allocation5 + $0x148] sm:$0xff]
    %v107 = vld [vmem:[#allocation5 + $0x150] sm:$0xff]
    %v108 = vld [vmem:[#allocation5 + $0x158] sm:$0xff]
    %v109 = vld [vmem:[#allocation5 + $0x160] sm:$0xff]
    %v110 = vld [vmem:[#allocation5 + $0x168] sm:$0xff]
    %v111 = vld [vmem:[#allocation5 + $0x170] sm:$0xff]
    %v112 = vld [vmem:[#allocation5 + $0x178] sm:$0xff]
    %v113 = vld [vmem:[#allocation5 + $0x180] sm:$0xff]
    %v114 = vld [vmem:[#allocation5 + $0x188] sm:$0xff]
    %v115 = vld [vmem:[#allocation5 + $0x190] sm:$0xff]
    %v116 = vld [vmem:[#allocation5 + $0x198] sm:$0xff]
    %v117 = vld [vmem:[#allocation5 + $0x1a0] sm:$0xff]
    %v118 = vld [vmem:[#allocation5 + $0x1a8] sm:$0xff]
    %v119 = vld [vmem:[#allocation5 + $0x1b0] sm:$0xff]
    %v120 = vld [vmem:[#allocation5 + $0x1b8] sm:$0xff]
    %v121 = vld [vmem:[#allocation5 + $0x1c0] sm:$0xff]
    %v122 = vld [vmem:[#allocation5 + $0x1c8] sm:$0xff]
    %v123 = vld [vmem:[#allocation5 + $0x1d0] sm:$0xff]
    %v124 = vld [vmem:[#allocation5 + $0x1d8] sm:$0xff]
    %v125 = vld [vmem:[#allocation5 + $0x1e0] sm:$0xff]
    %v126 = vld [vmem:[#allocation5 + $0x1e8] sm:$0xff]
    %v127 = vld [vmem:[#allocation5 + $0x1f0] sm:$0xff]
    %v128 = vld [vmem:[#allocation5 + $0x1f8] sm:$0xff]
    %v129 = vld [vmem:[#allocation5 + $0x200] sm:$0xff]
    %v130 = vld [vmem:[#allocation5 + $0x208] sm:$0xff]
    %v131 = vld [vmem:[#allocation5 + $0x210] sm:$0xff]
    %v132 = vld [vmem:[#allocation5 + $0x218] sm:$0xff]
    %v133 = vld [vmem:[#allocation5 + $0x220] sm:$0xff]
    %v134 = vld [vmem:[#allocation5 + $0x228] sm:$0xff]
    %v135 = vld [vmem:[#allocation5 + $0x230] sm:$0xff]
    %v136 = vld [vmem:[#allocation5 + $0x238] sm:$0xff]
    %v137 = vld [vmem:[#allocation5 + $0x240] sm:$0xff]
    %v138 = vld [vmem:[#allocation5 + $0x248] sm:$0xff]
    %v139 = vld [vmem:[#allocation5 + $0x250] sm:$0xff]
    %v140 = vld [vmem:[#allocation5 + $0x258] sm:$0xff]
    %v141 = vld [vmem:[#allocation5 + $0x260] sm:$0xff]
    %v142 = vld [vmem:[#allocation5 + $0x268] sm:$0xff]
    %v143 = vld [vmem:[#allocation5 + $0x270] sm:$0xff]
    %v144 = vld [vmem:[#allocation5 + $0x278] sm:$0xff]
    %v145 = vld [vmem:[#allocation5 + $0x280] sm:$0xff]
    %v146 = vld [vmem:[#allocation5 + $0x288] sm:$0xff]
    %v147 = vld [vmem:[#allocation5 + $0x290] sm:$0xff]
    %v148 = vld [vmem:[#allocation5 + $0x298] sm:$0xff]
    %v149 = vld [vmem:[#allocation5 + $0x2a0] sm:$0xff]
    %v150 = vld [vmem:[#allocation5 + $0x2a8] sm:$0xff]
    %v151 = vld [vmem:[#allocation5 + $0x2b0] sm:$0xff]
    %v152 = vld [vmem:[#allocation5 + $0x2b8] sm:$0xff]
    %v153 = vld [vmem:[#allocation5 + $0x2c0] sm:$0xff]
    %v154 = vld [vmem:[#allocation5 + $0x2c8] sm:$0xff]
    %v155 = vld [vmem:[#allocation5 + $0x2d0] sm:$0xff]
    %v156 = vld [vmem:[#allocation5 + $0x2d8] sm:$0xff]
    %v157 = vld [vmem:[#allocation5 + $0x2e0] sm:$0xff]
    %v158 = vld [vmem:[#allocation5 + $0x2e8] sm:$0xff]
    %v159 = vld [vmem:[#allocation5 + $0x2f0] sm:$0xff]
    %v160 = vld [vmem:[#allocation5 + $0x2f8] sm:$0xff]
    %v161 = vld [vmem:[#allocation5 + $0x300] sm:$0xff]
    %v162 = vld [vmem:[#allocation5 + $0x308] sm:$0xff]
    %v163 = vld [vmem:[%s2] sm:$0x3]
    %v165 = vlaneseq
    %v166 = vshrl.u32 %v165, 7
    %v167 = vsub.s32 0, %v166
    %v168 = vrot.slane %v163, %v167
    %v169 = vlaneseq
    %v170 = vshrl.u32 %v169, 7
    %v171 = vsub.s32 1, %v170
    %v172 = vrot.slane %v163, %v171
    %v179 = vunpack.c.l.b16 %v61
    %v180 = vunpack.c.h.b16 %v61
    %v181 = vunpack.c.l.b16 %v62
    %v182 = vunpack.c.h.b16 %v62
    %v183 = vunpack.c.l.b16 %v63
    %v184 = vunpack.c.h.b16 %v63
    %v185 = vunpack.c.l.b16 %v64
    %v186 = vpack.c.b16 %v179, %v179
    %v187 = vpack.c.b16 %v180, %v180
    %v188 = vpack.c.b16 %v181, %v181
    %v189 = vpack.c.b16 %v182, %v182
    %v190 = vpack.c.b16 %v183, %v183
    %v191 = vpack.c.b16 %v184, %v184
    %v192 = vpack.c.b16 %v185, %v185
    %v297 = vunpack.c.l.b16 %v65
    %v298 = vunpack.c.h.b16 %v65
    %v299 = vunpack.c.l.b16 %v66
    %v300 = vunpack.c.h.b16 %v66
    %v301 = vunpack.c.l.b16 %v67
    %v302 = vunpack.c.h.b16 %v67
    %v303 = vunpack.c.l.b16 %v68
    %v304 = vunpack.c.h.b16 %v68
    %v305 = vunpack.c.l.b16 %v69
    %v306 = vunpack.c.h.b16 %v69
    %v307 = vunpack.c.l.b16 %v70
    %v308 = vunpack.c.h.b16 %v70
    %v309 = vunpack.c.l.b16 %v71
    %v310 = vunpack.c.h.b16 %v71
    %v311 = vunpack.c.l.b16 %v72
    %v312 = vunpack.c.h.b16 %v72
    %v313 = vunpack.c.l.b16 %v73
    %v314 = vunpack.c.h.b16 %v73
    %v315 = vunpack.c.l.b16 %v74
    %v316 = vunpack.c.h.b16 %v74
    %v317 = vunpack.c.l.b16 %v75
    %v318 = vunpack.c.h.b16 %v75
    %v319 = vunpack.c.l.b16 %v76
    %v320 = vunpack.c.h.b16 %v76
    %v321 = vunpack.c.l.b16 %v77
    %v322 = vunpack.c.h.b16 %v77
    %v323 = vunpack.c.l.b16 %v78
    %v324 = vunpack.c.h.b16 %v78
    %v325 = vunpack.c.l.b16 %v79
    %v326 = vunpack.c.h.b16 %v79
    %v327 = vunpack.c.l.b16 %v80
    %v328 = vunpack.c.h.b16 %v80
    %v329 = vunpack.c.l.b16 %v81
    %v330 = vunpack.c.h.b16 %v81
    %v331 = vunpack.c.l.b16 %v82
    %v332 = vunpack.c.h.b16 %v82
    %v333 = vunpack.c.l.b16 %v83
    %v334 = vunpack.c.h.b16 %v83
    %v335 = vunpack.c.l.b16 %v84
    %v336 = vunpack.c.h.b16 %v84
    %v337 = vunpack.c.l.b16 %v85
    %v338 = vunpack.c.h.b16 %v85
    %v339 = vunpack.c.l.b16 %v86
    %v340 = vunpack.c.h.b16 %v86
    %v341 = vunpack.c.l.b16 %v87
    %v342 = vunpack.c.h.b16 %v87
    %v343 = vunpack.c.l.b16 %v88
    %v344 = vunpack.c.h.b16 %v88
    %v345 = vunpack.c.l.b16 %v89
    %v346 = vunpack.c.h.b16 %v89
    %v347 = vunpack.c.l.b16 %v90
    %v348 = vunpack.c.h.b16 %v90
    %v349 = vunpack.c.l.b16 %v91
    %v350 = vunpack.c.h.b16 %v91
    %v351 = vunpack.c.l.b16 %v92
    %v352 = vunpack.c.h.b16 %v92
    %v353 = vunpack.c.l.b16 %v93
    %v354 = vunpack.c.h.b16 %v93
    %v355 = vunpack.c.l.b16 %v94
    %v356 = vunpack.c.h.b16 %v94
    %v357 = vunpack.c.l.b16 %v95
    %v358 = vunpack.c.h.b16 %v95
    %v359 = vunpack.c.l.b16 %v96
    %v360 = vunpack.c.h.b16 %v96
    %v361 = vunpack.c.l.b16 %v97
    %v362 = vunpack.c.h.b16 %v97
    %v363 = vunpack.c.l.b16 %v98
    %v364 = vunpack.c.h.b16 %v98
    %v365 = vunpack.c.l.b16 %v99
    %v366 = vunpack.c.h.b16 %v99
    %v367 = vunpack.c.l.b16 %v100
    %v368 = vunpack.c.h.b16 %v100
    %v369 = vunpack.c.l.b16 %v101
    %v370 = vunpack.c.h.b16 %v101
    %v371 = vunpack.c.l.b16 %v102
    %v372 = vunpack.c.h.b16 %v102
    %v373 = vunpack.c.l.b16 %v103
    %v374 = vunpack.c.h.b16 %v103
    %v375 = vunpack.c.l.b16 %v104
    %v376 = vunpack.c.h.b16 %v104
    %v377 = vunpack.c.l.b16 %v105
    %v378 = vunpack.c.h.b16 %v105
    %v379 = vunpack.c.l.b16 %v106
    %v380 = vunpack.c.h.b16 %v106
    %v381 = vunpack.c.l.b16 %v107
    %v382 = vunpack.c.h.b16 %v107
    %v383 = vunpack.c.l.b16 %v108
    %v384 = vunpack.c.h.b16 %v108
    %v385 = vunpack.c.l.b16 %v109
    %v386 = vunpack.c.h.b16 %v109
    %v387 = vunpack.c.l.b16 %v110
    %v388 = vunpack.c.h.b16 %v110
    %v389 = vunpack.c.l.b16 %v111
    %v390 = vunpack.c.h.b16 %v111
    %v391 = vunpack.c.l.b16 %v112
    %v392 = vunpack.c.h.b16 %v112
    %v393 = vunpack.c.l.b16 %v113
    %v394 = vunpack.c.h.b16 %v113
    %v395 = vunpack.c.l.b16 %v114
    %v396 = vunpack.c.h.b16 %v114
    %v397 = vunpack.c.l.b16 %v115
    %v398 = vunpack.c.h.b16 %v115
    %v399 = vunpack.c.l.b16 %v116
    %v400 = vunpack.c.h.b16 %v116
    %v401 = vunpack.c.l.b16 %v117
    %v402 = vunpack.c.h.b16 %v117
    %v403 = vunpack.c.l.b16 %v118
    %v404 = vunpack.c.h.b16 %v118
    %v405 = vunpack.c.l.b16 %v119
    %v406 = vunpack.c.h.b16 %v119
    %v407 = vunpack.c.l.b16 %v120
    %v408 = vunpack.c.h.b16 %v120
    %v409 = vunpack.c.l.b16 %v121
    %v410 = vunpack.c.h.b16 %v121
    %v411 = vunpack.c.l.b16 %v122
    %v412 = vunpack.c.h.b16 %v122
    %v413 = vunpack.c.l.b16 %v123
    %v414 = vunpack.c.h.b16 %v123
    %v415 = vunpack.c.l.b16 %v124
    %v416 = vunpack.c.h.b16 %v124
    %v417 = vunpack.c.l.b16 %v125
    %v418 = vunpack.c.h.b16 %v125
    %v419 = vunpack.c.l.b16 %v126
    %v420 = vunpack.c.h.b16 %v126
    %v421 = vunpack.c.l.b16 %v127
    %v422 = vunpack.c.h.b16 %v127
    %v423 = vunpack.c.l.b16 %v128
    %v424 = vunpack.c.h.b16 %v128
    %v425 = vunpack.c.l.b16 %v129
    %v426 = vunpack.c.h.b16 %v129
    %v427 = vunpack.c.l.b16 %v130
    %v428 = vunpack.c.h.b16 %v130
    %v429 = vunpack.c.l.b16 %v131
    %v430 = vunpack.c.h.b16 %v131
    %v431 = vunpack.c.l.b16 %v132
    %v432 = vunpack.c.h.b16 %v132
    %v433 = vunpack.c.l.b16 %v133
    %v434 = vunpack.c.h.b16 %v133
    %v435 = vunpack.c.l.b16 %v134
    %v436 = vunpack.c.h.b16 %v134
    %v437 = vunpack.c.l.b16 %v135
    %v438 = vunpack.c.h.b16 %v135
    %v439 = vunpack.c.l.b16 %v136
    %v440 = vunpack.c.h.b16 %v136
    %v441 = vunpack.c.l.b16 %v137
    %v442 = vunpack.c.h.b16 %v137
    %v443 = vunpack.c.l.b16 %v138
    %v444 = vunpack.c.h.b16 %v138
    %v445 = vunpack.c.l.b16 %v139
    %v446 = vunpack.c.h.b16 %v139
    %v447 = vunpack.c.l.b16 %v140
    %v448 = vunpack.c.h.b16 %v140
    %v449 = vunpack.c.l.b16 %v141
    %v450 = vunpack.c.h.b16 %v141
    %v451 = vunpack.c.l.b16 %v142
    %v452 = vunpack.c.h.b16 %v142
    %v453 = vunpack.c.l.b16 %v143
    %v454 = vunpack.c.h.b16 %v143
    %v455 = vunpack.c.l.b16 %v144
    %v456 = vunpack.c.h.b16 %v144
    %v457 = vunpack.c.l.b16 %v145
    %v458 = vunpack.c.h.b16 %v145
    %v459 = vunpack.c.l.b16 %v146
    %v460 = vunpack.c.h.b16 %v146
    %v461 = vunpack.c.l.b16 %v147
    %v462 = vunpack.c.h.b16 %v147
    %v463 = vunpack.c.l.b16 %v148
    %v464 = vunpack.c.h.b16 %v148
    %v465 = vunpack.c.l.b16 %v149
    %v466 = vunpack.c.h.b16 %v149
    %v467 = vunpack.c.l.b16 %v150
    %v468 = vunpack.c.h.b16 %v150
    %v469 = vunpack.c.l.b16 %v151
    %v470 = vunpack.c.h.b16 %v151
    %v471 = vunpack.c.l.b16 %v152
    %v472 = vunpack.c.h.b16 %v152
    %v473 = vunpack.c.l.b16 %v153
    %v474 = vunpack.c.h.b16 %v153
    %v475 = vunpack.c.l.b16 %v154
    %v476 = vunpack.c.h.b16 %v154
    %v477 = vunpack.c.l.b16 %v155
    %v478 = vunpack.c.h.b16 %v155
    %v479 = vunpack.c.l.b16 %v156
    %v480 = vunpack.c.h.b16 %v156
    %v481 = vunpack.c.l.b16 %v157
    %v482 = vunpack.c.h.b16 %v157
    %v483 = vunpack.c.l.b16 %v158
    %v484 = vunpack.c.h.b16 %v158
    %v485 = vunpack.c.l.b16 %v159
    %v486 = vunpack.c.h.b16 %v159
    %v487 = vunpack.c.l.b16 %v160
    %v488 = vunpack.c.h.b16 %v160
    %v489 = vunpack.c.l.b16 %v161
    %v490 = vunpack.c.h.b16 %v161
    %v491 = vunpack.c.l.b16 %v162
    %v492 = vunpack.c.h.b16 %v162
    %v493 = vpack.c.b16 %v299, %v297
    %v494 = vpack.c.b16 %v300, %v298
    %v495 = vpack.c.b16 %v303, %v301
    %v496 = vpack.c.b16 %v304, %v302
    %v497 = vpack.c.b16 %v307, %v305
    %v498 = vpack.c.b16 %v308, %v306
    %v499 = vpack.c.b16 %v311, %v309
    %v500 = vpack.c.b16 %v312, %v310
    %v501 = vpack.c.b16 %v315, %v313
    %v502 = vpack.c.b16 %v316, %v314
    %v503 = vpack.c.b16 %v319, %v317
    %v504 = vpack.c.b16 %v320, %v318
    %v505 = vpack.c.b16 %v323, %v321
    %v506 = vpack.c.b16 %v324, %v322
    %v507 = vpack.c.b16 %v327, %v325
    %v508 = vpack.c.b16 %v328, %v326
    %v509 = vpack.c.b16 %v331, %v329
    %v510 = vpack.c.b16 %v332, %v330
    %v511 = vpack.c.b16 %v335, %v333
    %v512 = vpack.c.b16 %v336, %v334
    %v513 = vpack.c.b16 %v339, %v337
    %v514 = vpack.c.b16 %v340, %v338
    %v515 = vpack.c.b16 %v343, %v341
    %v516 = vpack.c.b16 %v344, %v342
    %v517 = vpack.c.b16 %v347, %v345
    %v518 = vpack.c.b16 %v348, %v346
    %v519 = vpack.c.b16 %v351, %v349
    %v520 = vpack.c.b16 %v352, %v350
    %v521 = vpack.c.b16 %v355, %v353
    %v522 = vpack.c.b16 %v356, %v354
    %v523 = vpack.c.b16 %v359, %v357
    %v524 = vpack.c.b16 %v360, %v358
    %v525 = vpack.c.b16 %v363, %v361
    %v526 = vpack.c.b16 %v364, %v362
    %v527 = vpack.c.b16 %v367, %v365
    %v528 = vpack.c.b16 %v368, %v366
    %v529 = vpack.c.b16 %v371, %v369
    %v530 = vpack.c.b16 %v372, %v370
    %v531 = vpack.c.b16 %v375, %v373
    %v532 = vpack.c.b16 %v376, %v374
    %v533 = vpack.c.b16 %v379, %v377
    %v534 = vpack.c.b16 %v380, %v378
    %v535 = vpack.c.b16 %v383, %v381
    %v536 = vpack.c.b16 %v384, %v382
    %v537 = vpack.c.b16 %v387, %v385
    %v538 = vpack.c.b16 %v388, %v386
    %v539 = vpack.c.b16 %v391, %v389
    %v540 = vpack.c.b16 %v392, %v390
    %v541 = vpack.c.b16 %v395, %v393
    %v542 = vpack.c.b16 %v396, %v394
    %v543 = vpack.c.b16 %v399, %v397
    %v544 = vpack.c.b16 %v400, %v398
    %v545 = vpack.c.b16 %v403, %v401
    %v546 = vpack.c.b16 %v404, %v402
    %v547 = vpack.c.b16 %v407, %v405
    %v548 = vpack.c.b16 %v408, %v406
    %v549 = vpack.c.b16 %v411, %v409
    %v550 = vpack.c.b16 %v412, %v410
    %v551 = vpack.c.b16 %v415, %v413
    %v552 = vpack.c.b16 %v416, %v414
    %v553 = vpack.c.b16 %v419, %v417
    %v554 = vpack.c.b16 %v420, %v418
    %v555 = vpack.c.b16 %v423, %v421
    %v556 = vpack.c.b16 %v424, %v422
    %v557 = vpack.c.b16 %v427, %v425
    %v558 = vpack.c.b16 %v428, %v426
    %v559 = vpack.c.b16 %v431, %v429
    %v560 = vpack.c.b16 %v432, %v430
    %v561 = vpack.c.b16 %v435, %v433
    %v562 = vpack.c.b16 %v436, %v434
    %v563 = vpack.c.b16 %v439, %v437
    %v564 = vpack.c.b16 %v440, %v438
    %v565 = vpack.c.b16 %v443, %v441
    %v566 = vpack.c.b16 %v444, %v442
    %v567 = vpack.c.b16 %v447, %v445
    %v568 = vpack.c.b16 %v448, %v446
    %v569 = vpack.c.b16 %v451, %v449
    %v570 = vpack.c.b16 %v452, %v450
    %v571 = vpack.c.b16 %v455, %v453
    %v572 = vpack.c.b16 %v456, %v454
    %v573 = vpack.c.b16 %v459, %v457
    %v574 = vpack.c.b16 %v460, %v458
    %v575 = vpack.c.b16 %v463, %v461
    %v576 = vpack.c.b16 %v464, %v462
    %v577 = vpack.c.b16 %v467, %v465
    %v578 = vpack.c.b16 %v468, %v466
    %v579 = vpack.c.b16 %v471, %v469
    %v580 = vpack.c.b16 %v472, %v470
    %v581 = vpack.c.b16 %v475, %v473
    %v582 = vpack.c.b16 %v476, %v474
    %v583 = vpack.c.b16 %v479, %v477
    %v584 = vpack.c.b16 %v480, %v478
    %v585 = vpack.c.b16 %v483, %v481
    %v586 = vpack.c.b16 %v484, %v482
    %v587 = vpack.c.b16 %v487, %v485
    %v588 = vpack.c.b16 %v488, %v486
    %v589 = vpack.c.b16 %v491, %v489
    %v590 = vpack.c.b16 %v492, %v490
    %vm689 = vcmask 130048
    %v691 = vsel %vm689, %v192, 0
    %693 = vmatprep.subr.bf16.mxu0 %v508
    %694 = vmatpush1.bf16.msra.mxu0 %v507
    %695 = vmatprep.subr.bf16.mxu0 %v506
    %696 = vmatpush1.bf16.msra.mxu0 %v505
    %697 = vmatprep.subr.bf16.mxu0 %v504
    %698 = vmatpush1.bf16.msra.mxu0 %v503
    %699 = vmatprep.subr.bf16.mxu0 %v502
    %700 = vmatpush1.bf16.msra.mxu0 %v501
    %701 = vmatprep.subr.bf16.mxu0 %v500
    %702 = vmatpush1.bf16.msra.mxu0 %v499
    %703 = vmatprep.subr.bf16.mxu0 %v498
    %704 = vmatpush1.bf16.msra.mxu0 %v497
    %705 = vmatprep.subr.bf16.mxu0 %v496
    %706 = vmatpush1.bf16.msra.mxu0 %v495
    %707 = vmatprep.subr.bf16.mxu0 %v494
    %708 = vmatpush1.bf16.msra.mxu0 %v493
    %709 = vmatprep.subr.bf16.mxu0 %v524
    %710 = vmatpush2.bf16.msra.mxu0 %v523
    %711 = vmatprep.subr.bf16.mxu0 %v522
    %712 = vmatpush2.bf16.msra.mxu0 %v521
    %713 = vmatprep.subr.bf16.mxu0 %v520
    %714 = vmatpush2.bf16.msra.mxu0 %v519
    %715 = vmatprep.subr.bf16.mxu0 %v518
    %716 = vmatpush2.bf16.msra.mxu0 %v517
    %717 = vmatprep.subr.bf16.mxu0 %v516
    %718 = vmatpush2.bf16.msra.mxu0 %v515
    %719 = vmatprep.subr.bf16.mxu0 %v514
    %720 = vmatpush2.bf16.msra.mxu0 %v513
    %721 = vmatprep.subr.bf16.mxu0 %v512
    %722 = vmatpush2.bf16.msra.mxu0 %v511
    %723 = vmatprep.subr.bf16.mxu0 %v510
    %724 = vmatpush2.bf16.msra.mxu0 %v509
    %725 = vmatprep.mubr.bf16.mxu0 %v187
    %726 = vmatmul.mubr.bf16.gmra.mxu0 %v186
    %v727 = vpop.f32.mrf.mxu0
    %v728 = vadd.f32 %v168, %v727
    %v729 = vpop.f32.mrf.mxu0
    %v730 = vadd.f32 %v172, %v729
    %v731 = vpop.f32.mrf.mxu0
    %v732 = vpop.f32.mrf.mxu0
    %733 = vdwg.mxu0
    %734 = vmatprep.subr.bf16.mxu0 %v540
    %735 = vmatpush1.bf16.msra.mxu0 %v539
    %736 = vmatprep.subr.bf16.mxu0 %v538
    %737 = vmatpush1.bf16.msra.mxu0 %v537
    %738 = vmatprep.subr.bf16.mxu0 %v536
    %739 = vmatpush1.bf16.msra.mxu0 %v535
    %740 = vmatprep.subr.bf16.mxu0 %v534
    %741 = vmatpush1.bf16.msra.mxu0 %v533
    %742 = vmatprep.subr.bf16.mxu0 %v532
    %743 = vmatpush1.bf16.msra.mxu0 %v531
    %744 = vmatprep.subr.bf16.mxu0 %v530
    %745 = vmatpush1.bf16.msra.mxu0 %v529
    %746 = vmatprep.subr.bf16.mxu0 %v528
    %747 = vmatpush1.bf16.msra.mxu0 %v527
    %748 = vmatprep.subr.bf16.mxu0 %v526
    %749 = vmatpush1.bf16.msra.mxu0 %v525
    %750 = vmatprep.subr.bf16.mxu0 %v556
    %751 = vmatpush2.bf16.msra.mxu0 %v555
    %752 = vmatprep.subr.bf16.mxu0 %v554
    %753 = vmatpush2.bf16.msra.mxu0 %v553
    %754 = vmatprep.subr.bf16.mxu0 %v552
    %755 = vmatpush2.bf16.msra.mxu0 %v551
    %756 = vmatprep.subr.bf16.mxu0 %v550
    %757 = vmatpush2.bf16.msra.mxu0 %v549
    %758 = vmatprep.subr.bf16.mxu0 %v548
    %759 = vmatpush2.bf16.msra.mxu0 %v547
    %760 = vmatprep.subr.bf16.mxu0 %v546
    %761 = vmatpush2.bf16.msra.mxu0 %v545
    %762 = vmatprep.subr.bf16.mxu0 %v544
    %763 = vmatpush2.bf16.msra.mxu0 %v543
    %764 = vmatprep.subr.bf16.mxu0 %v542
    %765 = vmatpush2.bf16.msra.mxu0 %v541
    %766 = vmatprep.mubr.bf16.mxu0 %v189
    %767 = vmatmul.mubr.bf16.gmra.mxu0 %v188
    %v768 = vpop.f32.mrf.mxu0
    %v769 = vadd.f32 %v728, %v768
    %v770 = vpop.f32.mrf.mxu0
    %v771 = vadd.f32 %v730, %v770
    %v772 = vpop.f32.mrf.mxu0
    %v773 = vpop.f32.mrf.mxu0
    %774 = vdwg.mxu0
    %775 = vmatprep.subr.bf16.mxu0 %v572
    %776 = vmatpush1.bf16.msra.mxu0 %v571
    %777 = vmatprep.subr.bf16.mxu0 %v570
    %778 = vmatpush1.bf16.msra.mxu0 %v569
    %779 = vmatprep.subr.bf16.mxu0 %v568
    %780 = vmatpush1.bf16.msra.mxu0 %v567
    %781 = vmatprep.subr.bf16.mxu0 %v566
    %782 = vmatpush1.bf16.msra.mxu0 %v565
    %783 = vmatprep.subr.bf16.mxu0 %v564
    %784 = vmatpush1.bf16.msra.mxu0 %v563
    %785 = vmatprep.subr.bf16.mxu0 %v562
    %786 = vmatpush1.bf16.msra.mxu0 %v561
    %787 = vmatprep.subr.bf16.mxu0 %v560
    %788 = vmatpush1.bf16.msra.mxu0 %v559
    %789 = vmatprep.subr.bf16.mxu0 %v558
    %790 = vmatpush1.bf16.msra.mxu0 %v557
    %791 = vmatprep.subr.bf16.mxu0 %v588
    %792 = vmatpush2.bf16.msra.mxu0 %v587
    %793 = vmatprep.subr.bf16.mxu0 %v586
    %794 = vmatpush2.bf16.msra.mxu0 %v585
    %795 = vmatprep.subr.bf16.mxu0 %v584
    %796 = vmatpush2.bf16.msra.mxu0 %v583
    %797 = vmatprep.subr.bf16.mxu0 %v582
    %798 = vmatpush2.bf16.msra.mxu0 %v581
    %799 = vmatprep.subr.bf16.mxu0 %v580
    %800 = vmatpush2.bf16.msra.mxu0 %v579
    %801 = vmatprep.subr.bf16.mxu0 %v578
    %802 = vmatpush2.bf16.msra.mxu0 %v577
    %803 = vmatprep.subr.bf16.mxu0 %v576
    %804 = vmatpush2.bf16.msra.mxu0 %v575
    %805 = vmatprep.subr.bf16.mxu0 %v574
    %806 = vmatpush2.bf16.msra.mxu0 %v573
    %807 = vmatprep.mubr.bf16.mxu0 %v191
    %808 = vmatmul.mubr.bf16.gmra.mxu0 %v190
    %v809 = vpop.f32.mrf.mxu0
    %v810 = vadd.f32 %v769, %v809
    %v811 = vpop.f32.mrf.mxu0
    %v812 = vadd.f32 %v771, %v811
    %v813 = vpop.f32.mrf.mxu0
    %v814 = vpop.f32.mrf.mxu0
    %815 = vdwg.mxu0
    %816 = vmatprep.subr.bf16.mxu0 0
    %817 = vmatpush1.bf16.msra.mxu0 0
    %818 = vmatprep.subr.bf16.mxu0 0
    %819 = vmatpush1.bf16.msra.mxu0 0
    %820 = vmatprep.subr.bf16.mxu0 0
    %821 = vmatpush1.bf16.msra.mxu0 0
    %822 = vmatprep.subr.bf16.mxu0 0
    %823 = vmatpush1.bf16.msra.mxu0 0
    %824 = vmatprep.subr.bf16.mxu0 0
    %825 = vmatpush1.bf16.msra.mxu0 0
    %826 = vmatprep.subr.bf16.mxu0 0
    %827 = vmatpush1.bf16.msra.mxu0 0
    %828 = vmatprep.subr.bf16.mxu0 0
    %829 = vmatpush1.bf16.msra.mxu0 0
    %830 = vmatprep.subr.bf16.mxu0 %v590
    %831 = vmatpush1.bf16.msra.mxu0 %v589
    %832 = vmatprep.subr.bf16.mxu0 0
    %833 = vmatpush2.bf16.msra.mxu0 0
    %834 = vmatprep.subr.bf16.mxu0 0
    %835 = vmatpush2.bf16.msra.mxu0 0
    %836 = vmatprep.subr.bf16.mxu0 0
    %837 = vmatpush2.bf16.msra.mxu0 0
    %838 = vmatprep.subr.bf16.mxu0 0
    %839 = vmatpush2.bf16.msra.mxu0 0
    %840 = vmatprep.subr.bf16.mxu0 0
    %841 = vmatpush2.bf16.msra.mxu0 0
    %842 = vmatprep.subr.bf16.mxu0 0
    %843 = vmatpush2.bf16.msra.mxu0 0
    %844 = vmatprep.subr.bf16.mxu0 0
    %845 = vmatpush2.bf16.msra.mxu0 0
    %846 = vmatprep.subr.bf16.mxu0 0
    %847 = vmatpush2.bf16.msra.mxu0 0
    %848 = vmatprep.mubr.bf16.mxu0 0
    %849 = vmatmul.mubr.bf16.gmra.mxu0 %v691
    %v850 = vpop.f32.mrf.mxu0
    %v851 = vadd.f32 %v810, %v850
    %v852 = vpop.f32.mrf.mxu0
    %v853 = vadd.f32 %v812, %v852
    %v854 = vpop.f32.mrf.mxu0
    %v855 = vpop.f32.mrf.mxu0
    %856 = vdwg.mxu0
    %v857 = vpack.c.bf16 %v851, %v851
    %v858 = vpack.c.bf16 %v853, %v853
    %v859 = vld [vmem:[#allocation7] sm:$0xf]
    %v860 = vld [vmem:[#allocation7 + $0x4] sm:$0xf]
    %v861 = vld [vmem:[#allocation7 + $0x8] sm:$0xf]
    %v862 = vld [vmem:[#allocation7 + $0xc] sm:$0xf]
    %v863 = vld [vmem:[#allocation7 + $0x10] sm:$0xf]
    %v864 = vld [vmem:[#allocation7 + $0x14] sm:$0xf]
    %v865 = vld [vmem:[#allocation7 + $0x18] sm:$0xf]
    %v866 = vld [vmem:[#allocation7 + $0x1c] sm:$0xf]
    %v867 = vld [vmem:[#allocation7 + $0x20] sm:$0xf]
    %v868 = vld [vmem:[#allocation7 + $0x24] sm:$0xf]
    %v869 = vld [vmem:[#allocation7 + $0x28] sm:$0xf]
    %v870 = vld [vmem:[#allocation7 + $0x2c] sm:$0xf]
    %v871 = vld [vmem:[#allocation7 + $0x30] sm:$0xf]
    %v872 = vld [vmem:[#allocation7 + $0x34] sm:$0xf]
    %v873 = vld [vmem:[#allocation7 + $0x38] sm:$0xf]
    %v874 = vld [vmem:[#allocation7 + $0x3c] sm:$0xf]
    %v875 = vld [vmem:[#allocation7 + $0x40] sm:$0xf]
    %v876 = vld [vmem:[#allocation7 + $0x44] sm:$0xf]
    %v877 = vld [vmem:[#allocation7 + $0x48] sm:$0xf]
    %v878 = vld [vmem:[#allocation7 + $0x4c] sm:$0xf]
    %v879 = vld [vmem:[#allocation7 + $0x50] sm:$0xf]
    %v880 = vld [vmem:[#allocation7 + $0x54] sm:$0xf]
    %v881 = vld [vmem:[#allocation7 + $0x58] sm:$0xf]
    %v882 = vld [vmem:[#allocation7 + $0x5c] sm:$0xf]
    %v883 = vld [vmem:[#allocation7 + $0x60] sm:$0xf]
    %v884 = vld [vmem:[#allocation7 + $0x64] sm:$0xf]
    %v885 = vld [vmem:[#allocation7 + $0x68] sm:$0xf]
    %v886 = vld [vmem:[#allocation7 + $0x6c] sm:$0xf]
    %v887 = vld [vmem:[#allocation7 + $0x70] sm:$0xf]
    %v888 = vld [vmem:[#allocation7 + $0x74] sm:$0xf]
    %v889 = vld [vmem:[#allocation7 + $0x78] sm:$0xf]
    %v890 = vld [vmem:[#allocation7 + $0x7c] sm:$0xf]
    %v891 = vld [vmem:[%s4] sm:$0x1]
    %v893 = vlaneseq
    %v894 = vshrl.u32 %v893, 7
    %v895 = vsub.s32 0, %v894
    %v896 = vrot.slane %v891, %v895
    %v930 = vunpack.c.l.b16 %v859
    %v931 = vunpack.c.l.b16 %v860
    %v932 = vunpack.c.l.b16 %v861
    %v933 = vunpack.c.l.b16 %v862
    %v934 = vunpack.c.l.b16 %v863
    %v935 = vunpack.c.l.b16 %v864
    %v936 = vunpack.c.l.b16 %v865
    %v937 = vunpack.c.l.b16 %v866
    %v938 = vunpack.c.l.b16 %v867
    %v939 = vunpack.c.l.b16 %v868
    %v940 = vunpack.c.l.b16 %v869
    %v941 = vunpack.c.l.b16 %v870
    %v942 = vunpack.c.l.b16 %v871
    %v943 = vunpack.c.l.b16 %v872
    %v944 = vunpack.c.l.b16 %v873
    %v945 = vunpack.c.l.b16 %v874
    %v946 = vunpack.c.l.b16 %v875
    %v947 = vunpack.c.l.b16 %v876
    %v948 = vunpack.c.l.b16 %v877
    %v949 = vunpack.c.l.b16 %v878
    %v950 = vunpack.c.l.b16 %v879
    %v951 = vunpack.c.l.b16 %v880
    %v952 = vunpack.c.l.b16 %v881
    %v953 = vunpack.c.l.b16 %v882
    %v954 = vunpack.c.l.b16 %v883
    %v955 = vunpack.c.l.b16 %v884
    %v956 = vunpack.c.l.b16 %v885
    %v957 = vunpack.c.l.b16 %v886
    %v958 = vunpack.c.l.b16 %v887
    %v959 = vunpack.c.l.b16 %v888
    %v960 = vunpack.c.l.b16 %v889
    %v961 = vunpack.c.l.b16 %v890
    %v962 = vpack.c.b16 %v931, %v930
    %v963 = vpack.c.b16 %v933, %v932
    %v964 = vpack.c.b16 %v935, %v934
    %v965 = vpack.c.b16 %v937, %v936
    %v966 = vpack.c.b16 %v939, %v938
    %v967 = vpack.c.b16 %v941, %v940
    %v968 = vpack.c.b16 %v943, %v942
    %v969 = vpack.c.b16 %v945, %v944
    %v970 = vpack.c.b16 %v947, %v946
    %v971 = vpack.c.b16 %v949, %v948
    %v972 = vpack.c.b16 %v951, %v950
    %v973 = vpack.c.b16 %v953, %v952
    %v974 = vpack.c.b16 %v955, %v954
    %v975 = vpack.c.b16 %v957, %v956
    %v976 = vpack.c.b16 %v959, %v958
    %v977 = vpack.c.b16 %v961, %v960
    %994 = vmatprep.subr.bf16.mxu0 0
    %995 = vmatpush1.bf16.msra.mxu0 %v969
    %996 = vmatprep.subr.bf16.mxu0 0
    %997 = vmatpush1.bf16.msra.mxu0 %v968
    %998 = vmatprep.subr.bf16.mxu0 0
    %999 = vmatpush1.bf16.msra.mxu0 %v967
    %1000 = vmatprep.subr.bf16.mxu0 0
    %1001 = vmatpush1.bf16.msra.mxu0 %v966
    %1002 = vmatprep.subr.bf16.mxu0 0
    %1003 = vmatpush1.bf16.msra.mxu0 %v965
    %1004 = vmatprep.subr.bf16.mxu0 0
    %1005 = vmatpush1.bf16.msra.mxu0 %v964
    %1006 = vmatprep.subr.bf16.mxu0 0
    %1007 = vmatpush1.bf16.msra.mxu0 %v963
    %1008 = vmatprep.subr.bf16.mxu0 0
    %1009 = vmatpush1.bf16.msra.mxu0 %v962
    %1010 = vmatprep.subr.bf16.mxu0 0
    %1011 = vmatpush2.bf16.msra.mxu0 %v977
    %1012 = vmatprep.subr.bf16.mxu0 0
    %1013 = vmatpush2.bf16.msra.mxu0 %v976
    %1014 = vmatprep.subr.bf16.mxu0 0
    %1015 = vmatpush2.bf16.msra.mxu0 %v975
    %1016 = vmatprep.subr.bf16.mxu0 0
    %1017 = vmatpush2.bf16.msra.mxu0 %v974
    %1018 = vmatprep.subr.bf16.mxu0 0
    %1019 = vmatpush2.bf16.msra.mxu0 %v973
    %1020 = vmatprep.subr.bf16.mxu0 0
    %1021 = vmatpush2.bf16.msra.mxu0 %v972
    %1022 = vmatprep.subr.bf16.mxu0 0
    %1023 = vmatpush2.bf16.msra.mxu0 %v971
    %1024 = vmatprep.subr.bf16.mxu0 0
    %1025 = vmatpush2.bf16.msra.mxu0 %v970
    %1026 = vmatprep.mubr.bf16.mxu0 %v858
    %1027 = vmatmul.mubr.bf16.gmra.mxu0 %v857
    %v1028 = vpop.f32.mrf.mxu0
    %v1029 = vadd.f32 %v896, %v1028
    %v1030 = vpop.f32.mrf.mxu0
    %v1031 = vpop.f32.mrf.mxu0
    %v1032 = vpop.f32.mrf.mxu0
    %1033 = vdwg.mxu0
    %1034 = vst [vmem:[#allocation8] sm:$0xff] %v1029
    // Predicated region
    $region34: #{tpu_custom_call.1} parent=1 // pred_check
      _
    $region35: #{tpu_custom_call.1} parent=1 // pred_check_branch
      %1036 = sbr.rel (0) target = $region37
    $region36: #{tpu_custom_call.1} parent=1 // pred_region
      %s1038 = ssub.s32 128, 128
      %1039 = vsyncadd [#allocation4], %s1038
      %s1041 = sshll.u32 [#allocation8], 4
      %s1042 = int_to_ptr.vmem [resolvable:$true] %s1041
      %1044 = dma.vmem_to_hbm [thread:$0]  %s1042, 128, %s5, [#allocation4]
    $region37: #{tpu_custom_call.1} parent=1 // pred_fallthru
      _
    // Predicated region
    $region38: #{tpu_custom_call.1} parent=1 // pred_check
      _
    $region39: #{tpu_custom_call.1} parent=1 // pred_check_branch
      %1046 = sbr.rel (0) target = $region41
    $region40: #{tpu_custom_call.1} parent=1 // pred_region
      %1047 = dma.done [#allocation4], 128
    $region41: #{tpu_custom_call.1} parent=1 // pred_fallthru
      _
    %1048 = vsyncpa [#allocation3], 1
    %1049 = vsyncpa [#allocation6], 1
    %1050 = vsyncpa [#allocation4], 1

</llo_original>
